<compile_context>
chip_gen: v7x
topology: tpu7x:2x2x1
jax: 0.10.0
libtpu: 0.0.40
codegen_flags: <defaults>
</compile_context>

<pallas_src>
import math
import jax
import jax.numpy as jnp
from jax.experimental import pallas as pl
from jax.experimental.pallas import tpu as pltpu


def _round_up(a, b):
    return ((a + b - 1) // b) * b


# ---------------------------------------------------------------------------
# Fused Pallas kernel: one d1-tile of relu(relu(x@W1+b1)@W2+b2), written in
# permuted (d1, d0, O) layout.
# ---------------------------------------------------------------------------
def _prenet_kernel(x_ref, w1_ref, b1_ref, w2_ref, b2_ref, o_ref):
    # x_ref : (d0, t1, Din)   slab of t1 "time" rows for all d0 batch rows
    # w1_ref: (Din, Hpad)     b1_ref: (1, Hpad)   (biases kept in f32)
    # w2_ref: (Hpad, Opad)    b2_ref: (1, Opad)
    # o_ref : (t1, d0, Opad)  permuted (1,0,2) layout, written directly
    d0 = x_ref.shape[0]
    # d0 is the pre-permute batch dim (small); static unroll over it.
    for b in range(d0):
        xb = x_ref[b]                                              # (t1, Din)
        h = jnp.dot(xb, w1_ref[...], preferred_element_type=jnp.float32)
        h = jnp.maximum(h + b1_ref[...], 0.0)                      # ReLU (f32)
        y = jnp.dot(h.astype(w2_ref.dtype), w2_ref[...],
                    preferred_element_type=jnp.float32)
        y = jnp.maximum(y + b2_ref[...], 0.0)                      # ReLU (f32)
        o_ref[:, b, :] = y.astype(o_ref.dtype)


# ---------------------------------------------------------------------------
# One-time weight preparation (hoisted out of the forward pass)
# ---------------------------------------------------------------------------
def prepare_prenet_params(w1, b1, w2, b2, dtype=None):
    """PyTorch layout in: w1 (H, Din), b1 (H,), w2 (O, H), b2 (O,).
    Returns lane-padded, pre-transposed operands for the kernel."""
    H, Din = w1.shape
    O = w2.shape[0]
    Hpad = _round_up(H, 128)
    Opad = _round_up(O, 128)
    if dtype is None:
        dtype = w1.dtype
    # Zero pad columns/rows are mathematically inert: relu(0+0)=0, 0 @ W2 = 0.
    w1t = jnp.pad(w1.T, ((0, 0), (0, Hpad - H))).astype(dtype)          # (Din, Hpad)
    b1p = jnp.pad(b1, (0, Hpad - H)).reshape(1, Hpad).astype(jnp.float32)
    w2t = jnp.pad(w2.T, ((0, Hpad - H), (0, Opad - O))).astype(dtype)   # (Hpad, Opad)
    b2p = jnp.pad(b2, (0, Opad - O)).reshape(1, Opad).astype(jnp.float32)
    return dict(w1t=w1t, b1p=b1p, w2t=w2t, b2p=b2p, out_size=O)


# ---------------------------------------------------------------------------
# Prenet forward (PyTorch semantics): x (d0, d1, Din) -> (d1, d0, O)
# ---------------------------------------------------------------------------
def prenet_forward(x, params, *, tm=256):
    """The module's permute(1,0,2) is folded into the output index_map: the
    kernel writes blocks of shape (t1, d0, Opad) directly into the permuted
    output, so no HBM transpose of the activation is ever materialized.
    Assumes d0 (pre-permute batch dim) is modest; d1 (sequence) is tiled."""
    d0, d1, Din = x.shape
    w1t, b1p, w2t, b2p = params["w1t"], params["b1p"], params["w2t"], params["b2p"]
    O = params["out_size"]
    Hpad = w1t.shape[1]
    Opad = w2t.shape[1]

    # Tile over d1; keep all d0 rows inside a block.  Split into >= 2 grid
    # steps when d1 > 8 so "parallel" can shard across both v7x TensorCores.
    if d1 <= 8:
        t1 = d1                                   # single full block
    else:
        t1 = max(8, min(tm, _round_up(pl.cdiv(d1, 2), 8)))
    grid = (pl.cdiv(d1, t1),)

    # Explicit scoped-VMEM limit (v5e default is only 16 MiB): double-buffered
    # x/out blocks + (worst case double-buffered) resident weights + f32
    # intermediates, with 1.5x headroom, floored at 32 MiB.
    xb = x.dtype.itemsize
    wb = w1t.dtype.itemsize
    est = (2 * d0 * t1 * Din * xb
           + 2 * t1 * d0 * Opad * xb
           + 2 * (Din * Hpad + Hpad * Opad) * wb
           + 2 * (Hpad + Opad) * 4
           + d0 * t1 * (Hpad + Opad) * 4)
    vmem_limit = max(32 * 1024 * 1024, int(est * 1.5))

    out = pl.pallas_call(
        _prenet_kernel,
        out_shape=jax.ShapeDtypeStruct((d1, d0, Opad), x.dtype),
        grid_spec=pltpu.PrefetchScalarGridSpec(
            num_scalar_prefetch=0,
            grid=grid,
            in_specs=[
                pl.BlockSpec((d0, t1, Din), lambda j: (0, j, 0)),   # activations
                pl.BlockSpec((Din, Hpad), lambda j: (0, 0)),        # W1 (resident)
                pl.BlockSpec((1, Hpad), lambda j: (0, 0)),          # b1 (resident)
                pl.BlockSpec((Hpad, Opad), lambda j: (0, 0)),       # W2 (resident)
                pl.BlockSpec((1, Opad), lambda j: (0, 0)),          # b2 (resident)
            ],
            out_specs=pl.BlockSpec((t1, d0, Opad), lambda j: (j, 0, 0)),
        ),
        compiler_params=pltpu.CompilerParams(
            dimension_semantics=("parallel",),
            vmem_limit_bytes=vmem_limit),
    )(x, w1t, b1p, w2t, b2p)

    if Opad != O:
        out = out[:, :, :O]
    return out


# ---------------------------------------------------------------------------
# Deterministic parameter init matching Linear(__init__) in the module
# ---------------------------------------------------------------------------
def init_linear_params(key, in_dim, out_dim):
    kw, kb = jax.random.split(key)
    # xavier_uniform_ with gain = calculate_gain('linear') = 1.0
    bound_w = math.sqrt(6.0 / (in_dim + out_dim))
    weight = jax.random.uniform(kw, (out_dim, in_dim),
                                minval=-bound_w, maxval=bound_w,
                                dtype=jnp.float32)
    # nn.Linear default bias init: U(-1/sqrt(fan_in), 1/sqrt(fan_in))
    bound_b = 1.0 / math.sqrt(in_dim)
    bias = jax.random.uniform(kb, (out_dim,),
                              minval=-bound_b, maxval=bound_b,
                              dtype=jnp.float32)
    return weight, bias


if __name__ == "__main__":
    key = jax.random.PRNGKey(0)
    k_x, k_l1, k_l2 = jax.random.split(key, 3)

    # Small shapes consistent with Prenet: (batch=2, seq=16, input_size=32),
    # hidden_size=64, output_size=48.  Module returns (seq, batch, output).
    B, S, Din, H, O = 2, 16, 32, 64, 48
    x = jax.random.normal(k_x, (B, S, Din), dtype=jnp.float32)
    w1, b1 = init_linear_params(k_l1, Din, H)
    w2, b2 = init_linear_params(k_l2, H, O)

    # pure-JAX reference (eval mode: dropout = identity)
    xp = jnp.transpose(x, (1, 0, 2))
    h_ref = jnp.maximum(jnp.einsum('sbd,hd->sbh', xp, w1) + b1, 0.0)
    y_ref = jnp.maximum(jnp.einsum('sbh,oh->sbo', h_ref, w2) + b2, 0.0)

    # f32 path
    params = prepare_prenet_params(w1, b1, w2, b2)     # prepared ONCE
    y = prenet_forward(x, params)
    jax.block_until_ready(y)
    assert y.shape == (S, B, O)
    assert jnp.allclose(y, y_ref, atol=1e-5, rtol=1e-5)

    # bf16 path (halves HBM traffic / uses bf16 MXU rate on v6e & v7x)
    params_bf16 = prepare_prenet_params(w1, b1, w2, b2, dtype=jnp.bfloat16)
    y_bf16 = prenet_forward(x.astype(jnp.bfloat16), params_bf16)
    jax.block_until_ready(y_bf16)
    assert y_bf16.shape == (S, B, O)
    assert jnp.allclose(y_bf16.astype(jnp.float32), y_ref, atol=1e-1, rtol=1e-1)

    print("KERNEL_OK")
</pallas_src>

<mosaic_0001>
module attributes {stable_mosaic.version = 11 : i64} {
  func.func @_prenet_kernel(%arg0: i32, %arg1: memref<2x8x32xf32, #tpu.memory_space<vmem>>, %arg2: memref<32x128xf32, #tpu.memory_space<vmem>>, %arg3: memref<1x128xf32, #tpu.memory_space<vmem>>, %arg4: memref<128x128xf32, #tpu.memory_space<vmem>>, %arg5: memref<1x128xf32, #tpu.memory_space<vmem>>, %arg6: memref<8x2x128xf32, #tpu.memory_space<vmem>>) attributes {dimension_semantics = [#tpu.dimension_semantics<parallel>], iteration_bounds = array<i64: 2>, scalar_prefetch = 0 : i64, scratch_operands = 0 : i64, tpu.core_type = #tpu.core_type<tc>, window_params = [{transform_indices = @transform_0, window_bounds = array<i64: 2, 8, 32>}, {pipeline_mode = #tpu.pipeline_mode<synchronous>, transform_indices = @transform_1, window_bounds = array<i64: 32, 128>}, {pipeline_mode = #tpu.pipeline_mode<synchronous>, transform_indices = @transform_2, window_bounds = array<i64: 1, 128>}, {pipeline_mode = #tpu.pipeline_mode<synchronous>, transform_indices = @transform_3, window_bounds = array<i64: 128, 128>}, {pipeline_mode = #tpu.pipeline_mode<synchronous>, transform_indices = @transform_4, window_bounds = array<i64: 1, 128>}, {transform_indices = @transform_5, window_bounds = array<i64: 8, 2, 128>}]} {
    %c0 = arith.constant 0 : index
    %c0_0 = arith.constant 0 : index
    %c0_1 = arith.constant 0 : index
    %0 = vector.load %arg1[%c0, %c0_0, %c0_1] : memref<2x8x32xf32, #tpu.memory_space<vmem>>, vector<1x8x32xf32>
    %1 = vector.shape_cast %0 : vector<1x8x32xf32> to vector<8x32xf32>
    %c0_2 = arith.constant 0 : index
    %c0_3 = arith.constant 0 : index
    %2 = vector.load %arg2[%c0_2, %c0_3] : memref<32x128xf32, #tpu.memory_space<vmem>>, vector<32x128xf32>
    %cst = arith.constant dense<0.000000e+00> : vector<8x128xf32>
    %3 = tpu.matmul %1, %2, %cst {dimension_numbers = #tpu.dot_dimension_numbers<[1], [0], [0], [1], [0, 0, 1, 1], [], []>} : vector<8x32xf32>, vector<32x128xf32>, vector<8x128xf32> -> vector<8x128xf32>
    %c0_4 = arith.constant 0 : index
    %c0_5 = arith.constant 0 : index
    %4 = vector.load %arg3[%c0_4, %c0_5] : memref<1x128xf32, #tpu.memory_space<vmem>>, vector<1x128xf32>
    %5 = vector.broadcast %4 : vector<1x128xf32> to vector<8x128xf32>
    %6 = arith.addf %3, %5 : vector<8x128xf32>
    %cst_6 = arith.constant 0.000000e+00 : f32
    %7 = vector.broadcast %cst_6 : f32 to vector<8x128xf32>
    %8 = arith.maximumf %6, %7 : vector<8x128xf32>
    %c0_7 = arith.constant 0 : index
    %c0_8 = arith.constant 0 : index
    %9 = vector.load %arg4[%c0_7, %c0_8] : memref<128x128xf32, #tpu.memory_space<vmem>>, vector<128x128xf32>
    %cst_9 = arith.constant dense<0.000000e+00> : vector<8x128xf32>
    %10 = tpu.matmul %8, %9, %cst_9 {dimension_numbers = #tpu.dot_dimension_numbers<[1], [0], [0], [1], [0, 0, 1, 1], [], []>} : vector<8x128xf32>, vector<128x128xf32>, vector<8x128xf32> -> vector<8x128xf32>
    %c0_10 = arith.constant 0 : index
    %c0_11 = arith.constant 0 : index
    %11 = vector.load %arg5[%c0_10, %c0_11] : memref<1x128xf32, #tpu.memory_space<vmem>>, vector<1x128xf32>
    %12 = vector.broadcast %11 : vector<1x128xf32> to vector<8x128xf32>
    %13 = arith.addf %10, %12 : vector<8x128xf32>
    %cst_12 = arith.constant 0.000000e+00 : f32
    %14 = vector.broadcast %cst_12 : f32 to vector<8x128xf32>
    %15 = arith.maximumf %13, %14 : vector<8x128xf32>
    %c0_13 = arith.constant 0 : index
    %c0_14 = arith.constant 0 : index
    %c0_15 = arith.constant 0 : index
    %16 = vector.load %arg6[%c0_13, %c0_14, %c0_15] : memref<8x2x128xf32, #tpu.memory_space<vmem>>, vector<8x1x128xf32>
    %17 = vector.shape_cast %16 : vector<8x1x128xf32> to vector<8x128xf32>
    %18 = vector.shape_cast %15 : vector<8x128xf32> to vector<8x1x128xf32>
    tpu.vector_store %arg6[%c0_13, %c0_14, %c0_15], %18 {strides = array<i32>} : memref<8x2x128xf32, #tpu.memory_space<vmem>>, vector<8x1x128xf32>,
    %c1 = arith.constant 1 : index
    %c0_16 = arith.constant 0 : index
    %c0_17 = arith.constant 0 : index
    %19 = vector.load %arg1[%c1, %c0_16, %c0_17] : memref<2x8x32xf32, #tpu.memory_space<vmem>>, vector<1x8x32xf32>
    %20 = vector.shape_cast %19 : vector<1x8x32xf32> to vector<8x32xf32>
    %c0_18 = arith.constant 0 : index
    %c0_19 = arith.constant 0 : index
    %21 = vector.load %arg2[%c0_18, %c0_19] : memref<32x128xf32, #tpu.memory_space<vmem>>, vector<32x128xf32>
    %cst_20 = arith.constant dense<0.000000e+00> : vector<8x128xf32>
    %22 = tpu.matmul %20, %21, %cst_20 {dimension_numbers = #tpu.dot_dimension_numbers<[1], [0], [0], [1], [0, 0, 1, 1], [], []>} : vector<8x32xf32>, vector<32x128xf32>, vector<8x128xf32> -> vector<8x128xf32>
    %c0_21 = arith.constant 0 : index
    %c0_22 = arith.constant 0 : index
    %23 = vector.load %arg3[%c0_21, %c0_22] : memref<1x128xf32, #tpu.memory_space<vmem>>, vector<1x128xf32>
    %24 = vector.broadcast %23 : vector<1x128xf32> to vector<8x128xf32>
    %25 = arith.addf %22, %24 : vector<8x128xf32>
    %cst_23 = arith.constant 0.000000e+00 : f32
    %26 = vector.broadcast %cst_23 : f32 to vector<8x128xf32>
    %27 = arith.maximumf %25, %26 : vector<8x128xf32>
    %c0_24 = arith.constant 0 : index
    %c0_25 = arith.constant 0 : index
    %28 = vector.load %arg4[%c0_24, %c0_25] : memref<128x128xf32, #tpu.memory_space<vmem>>, vector<128x128xf32>
    %cst_26 = arith.constant dense<0.000000e+00> : vector<8x128xf32>
    %29 = tpu.matmul %27, %28, %cst_26 {dimension_numbers = #tpu.dot_dimension_numbers<[1], [0], [0], [1], [0, 0, 1, 1], [], []>} : vector<8x128xf32>, vector<128x128xf32>, vector<8x128xf32> -> vector<8x128xf32>
    %c0_27 = arith.constant 0 : index
    %c0_28 = arith.constant 0 : index
    %30 = vector.load %arg5[%c0_27, %c0_28] : memref<1x128xf32, #tpu.memory_space<vmem>>, vector<1x128xf32>
    %31 = vector.broadcast %30 : vector<1x128xf32> to vector<8x128xf32>
    %32 = arith.addf %29, %31 : vector<8x128xf32>
    %cst_29 = arith.constant 0.000000e+00 : f32
    %33 = vector.broadcast %cst_29 : f32 to vector<8x128xf32>
    %34 = arith.maximumf %32, %33 : vector<8x128xf32>
    %c0_30 = arith.constant 0 : index
    %c1_31 = arith.constant 1 : index
    %c0_32 = arith.constant 0 : index
    %35 = vector.load %arg6[%c0_30, %c1_31, %c0_32] : memref<8x2x128xf32, #tpu.memory_space<vmem>>, vector<8x1x128xf32>
    %36 = vector.shape_cast %35 : vector<8x1x128xf32> to vector<8x128xf32>
    %37 = vector.shape_cast %34 : vector<8x128xf32> to vector<8x1x128xf32>
    tpu.vector_store %arg6[%c0_30, %c1_31, %c0_32], %37 {strides = array<i32>} : memref<8x2x128xf32, #tpu.memory_space<vmem>>, vector<8x1x128xf32>,
    return
  }
  func.func @transform_0(%arg0: i32) -> (i32, i32, i32) {
    %c0_i32 = arith.constant 0 : i32
    %c0_i32_0 = arith.constant 0 : i32
    %c0_i32_1 = arith.constant 0 : i32
    return %c0_i32, %arg0, %c0_i32_0 : i32, i32, i32
  }
  func.func @transform_1(%arg0: i32) -> (i32, i32) {
    %c0_i32 = arith.constant 0 : i32
    %c0_i32_0 = arith.constant 0 : i32
    %c0_i32_1 = arith.constant 0 : i32
    return %c0_i32, %c0_i32_0 : i32, i32
  }
  func.func @transform_2(%arg0: i32) -> (i32, i32) {
    %c0_i32 = arith.constant 0 : i32
    %c0_i32_0 = arith.constant 0 : i32
    %c0_i32_1 = arith.constant 0 : i32
    return %c0_i32, %c0_i32_0 : i32, i32
  }
  func.func @transform_3(%arg0: i32) -> (i32, i32) {
    %c0_i32 = arith.constant 0 : i32
    %c0_i32_0 = arith.constant 0 : i32
    %c0_i32_1 = arith.constant 0 : i32
    return %c0_i32, %c0_i32_0 : i32, i32
  }
  func.func @transform_4(%arg0: i32) -> (i32, i32) {
    %c0_i32 = arith.constant 0 : i32
    %c0_i32_0 = arith.constant 0 : i32
    %c0_i32_1 = arith.constant 0 : i32
    return %c0_i32, %c0_i32_0 : i32, i32
  }
  func.func @transform_5(%arg0: i32) -> (i32, i32, i32) {
    %c0_i32 = arith.constant 0 : i32
    %c0_i32_0 = arith.constant 0 : i32
    %c0_i32_1 = arith.constant 0 : i32
    return %arg0, %c0_i32, %c0_i32_0 : i32, i32, i32
  }
}

</mosaic_0001>

<llo_original>
// kernel: tpu_custom_call.1
$region0: #{tpu_custom_call.1}
  #allocation0 [shape = 'u32[]', space=smem, size = 0x4, offset = 0x4, fixed_abs, tag = 'smem constant byte address 0x4 - core index']
  #allocation1 [shape = 'u32[144,128]{1,0:T(1,128)}', space=vmem, size = 0x12000, scoped, tag = 'internal scratch']
  %s0 = inlined_call_operand.hbm [shape: f32[2,16,32], index: 0, kind: input, shape index: {}]
  %s1 = inlined_call_operand.hbm [shape: f32[32,128], index: 1, kind: input, shape index: {}]
  %s2 = inlined_call_operand.vmem [shape: f32[1,128], index: 2, kind: input, shape index: {}]
  %s3 = inlined_call_operand.hbm [shape: f32[128,128], index: 3, kind: input, shape index: {}]
  %s4 = inlined_call_operand.vmem [shape: f32[1,128], index: 4, kind: input, shape index: {}]
  %s5 = inlined_call_operand.hbm [shape: f32[16,2,128], index: 5, kind: output, shape index: {}]
  %s6 = sld [smem:[#allocation0]]
  $region65: #{tpu_custom_call.1} parent=0
    _
  %s8 = ssub.s32 1, %s6
  %s9 = scalar_select 0, %s8, %s6
  $region1: #{tpu_custom_call.1} parent=0
    #allocation2 [shape = 'u8[16384]{0}', space=vmem, size = 0x4000, scoped, tag = 'input window, operand 0']
    #allocation3 [shape = 's32[2]{0}', space=sflag, size = 0x8, scoped, tag = 'scoped memory for tpu_custom_call.1']
    #allocation4 [shape = 's32[2]{0}', space=sflag, size = 0x8, scoped, tag = 'scoped memory for tpu_custom_call.1']
    #allocation5 [shape = 'u8[16384]{0}', space=vmem, size = 0x4000, scoped, tag = 'input window, operand 1, single buffered']
    #allocation6 [shape = 's32[1]{0}', space=sflag, size = 0x4, scoped, tag = 'scoped memory for tpu_custom_call.1']
    #allocation7 [shape = 'u8[65536]{0}', space=vmem, size = 0x10000, scoped, tag = 'input window, operand 3, single buffered']
    #allocation8 [shape = 'u8[16384]{0}', space=vmem, size = 0x4000, scoped, tag = 'output window, operand 0']
    %10 = vsyncpa [#allocation3], 0
    %s11 = scalar_lea.sflag [#allocation3], 1
    %12 = vsyncpa %s11, 0
    %13 = vsyncpa [#allocation6], 0
    %14 = vsyncpa [#allocation4], 0
    %s15 = scalar_lea.sflag [#allocation4], 1
    %16 = vsyncpa %s15, 0
    loop: start=0, step=1, limit=4
    $region2: #{tpu_custom_call.1} parent=1 // loop_pre_header
      _
    $region3: #{tpu_custom_call.1} parent=1 // loop_header
      %s18 = sphi 0, %s22
      %p19 = scmp.ge.s32.totalorder %s18, 4
      %s28 = sphi 0, %s30
      %s31 = sphi 0, %s28
      %s32 = sphi 0, %s31
      %s48 = sphi 0, %s32
      %s52 = sphi 0, %s52
      %s54 = sphi 0, %s52
      %s55 = sphi 0, %s54
      %s69 = sphi 0, %s55
      %s73 = sphi 0, %s73
      %s75 = sphi 0, %s73
      %s76 = sphi 0, %s75
      %s90 = sphi 0, %s76
      %s94 = sphi 0, %s94
      %s96 = sphi 0, %s94
      %s97 = sphi 0, %s96
      %s111 = sphi 0, %s97
      %s115 = sphi 0, %s115
      %s117 = sphi 0, %s115
      %s118 = sphi 0, %s117
      %s132 = sphi 0, %s118
      %s138 = sphi 0, %s140
      %s141 = sphi 0, %s138
      %s142 = sphi 0, %s141
      %s158 = sphi 0, %s142
    $region4: #{tpu_custom_call.1} parent=1 // loop_header_branch
      %21 = sbr.rel (%p19) target = $region8
    $region5: #{tpu_custom_call.1} parent=1 // loop_body
      %s23 = ssub.s32 %s18, 1
      %s24 = ssub.s32 %s18, 2
      %s25 = sadd.s32 %s18, 1
      %s26 = ssub.s32 %s18, %s25
      %p27 = scmp.eq.s32.totalorder %s26, 0
      %s29 = sadd.s32 %s28, 1
      %s30 = scalar_select %p27, %s28, %s29
      %p33 = pneg %p27
      %p34 = scmp.eq.s32.totalorder %s18, 1
      %p35 = por %p33, %p34
      %p36 = scmp.ne.s32.totalorder %s28, %s31
      %p37 = scmp.eq.s32.totalorder %s18, 0
      %p38 = por %p36, %p37
      %p39 = scmp.ne.s32.totalorder %s28, %s31
      %p40 = scmp.eq.s32.totalorder %s23, 1
      %p41 = por %p39, %p40
      %p42 = scmp.ne.s32.totalorder %s31, %s32
      %p43 = scmp.eq.s32.totalorder %s23, 0
      %p44 = por %p42, %p43
      %p45 = scmp.ne.s32.totalorder %s31, %s32
      %p46 = scmp.eq.s32.totalorder %s24, 1
      %p47 = por %p45, %p46
      %p49 = scmp.ne.s32.totalorder %s32, %s48
      %p50 = scmp.eq.s32.totalorder %s24, 0
      %p51 = por %p49, %p50
      %s53 = sadd.s32 %s52, 1
      %p56 = scmp.eq.s32.totalorder %s18, 1
      %p57 = scmp.ne.s32.totalorder %s52, %s54
      %p58 = scmp.eq.s32.totalorder %s18, 0
      %p59 = por %p57, %p58
      %p60 = scmp.ne.s32.totalorder %s52, %s54
      %p61 = scmp.eq.s32.totalorder %s23, 1
      %p62 = por %p60, %p61
      %p63 = scmp.ne.s32.totalorder %s54, %s55
      %p64 = scmp.eq.s32.totalorder %s23, 0
      %p65 = por %p63, %p64
      %p66 = scmp.ne.s32.totalorder %s54, %s55
      %p67 = scmp.eq.s32.totalorder %s24, 1
      %p68 = por %p66, %p67
      %p70 = scmp.ne.s32.totalorder %s55, %s69
      %p71 = scmp.eq.s32.totalorder %s24, 0
      %p72 = por %p70, %p71
      %s74 = sadd.s32 %s73, 1
      %p77 = scmp.eq.s32.totalorder %s18, 1
      %p78 = scmp.ne.s32.totalorder %s73, %s75
      %p79 = scmp.eq.s32.totalorder %s18, 0
      %p80 = por %p78, %p79
      %p81 = scmp.ne.s32.totalorder %s73, %s75
      %p82 = scmp.eq.s32.totalorder %s23, 1
      %p83 = por %p81, %p82
      %p84 = scmp.ne.s32.totalorder %s75, %s76
      %p85 = scmp.eq.s32.totalorder %s23, 0
      %p86 = por %p84, %p85
      %p87 = scmp.ne.s32.totalorder %s75, %s76
      %p88 = scmp.eq.s32.totalorder %s24, 1
      %p89 = por %p87, %p88
      %p91 = scmp.ne.s32.totalorder %s76, %s90
      %p92 = scmp.eq.s32.totalorder %s24, 0
      %p93 = por %p91, %p92
      %s95 = sadd.s32 %s94, 1
      %p98 = scmp.eq.s32.totalorder %s18, 1
      %p99 = scmp.ne.s32.totalorder %s94, %s96
      %p100 = scmp.eq.s32.totalorder %s18, 0
      %p101 = por %p99, %p100
      %p102 = scmp.ne.s32.totalorder %s94, %s96
      %p103 = scmp.eq.s32.totalorder %s23, 1
      %p104 = por %p102, %p103
      %p105 = scmp.ne.s32.totalorder %s96, %s97
      %p106 = scmp.eq.s32.totalorder %s23, 0
      %p107 = por %p105, %p106
      %p108 = scmp.ne.s32.totalorder %s96, %s97
      %p109 = scmp.eq.s32.totalorder %s24, 1
      %p110 = por %p108, %p109
      %p112 = scmp.ne.s32.totalorder %s97, %s111
      %p113 = scmp.eq.s32.totalorder %s24, 0
      %p114 = por %p112, %p113
      %s116 = sadd.s32 %s115, 1
      %p119 = scmp.eq.s32.totalorder %s18, 1
      %p120 = scmp.ne.s32.totalorder %s115, %s117
      %p121 = scmp.eq.s32.totalorder %s18, 0
      %p122 = por %p120, %p121
      %p123 = scmp.ne.s32.totalorder %s115, %s117
      %p124 = scmp.eq.s32.totalorder %s23, 1
      %p125 = por %p123, %p124
      %p126 = scmp.ne.s32.totalorder %s117, %s118
      %p127 = scmp.eq.s32.totalorder %s23, 0
      %p128 = por %p126, %p127
      %p129 = scmp.ne.s32.totalorder %s117, %s118
      %p130 = scmp.eq.s32.totalorder %s24, 1
      %p131 = por %p129, %p130
      %p133 = scmp.ne.s32.totalorder %s118, %s132
      %p134 = scmp.eq.s32.totalorder %s24, 0
      %p135 = por %p133, %p134
      %s136 = ssub.s32 %s18, %s25
      %p137 = scmp.eq.s32.totalorder %s136, 0
      %s139 = sadd.s32 %s138, 1
      %s140 = scalar_select %p137, %s138, %s139
      %p143 = pneg %p137
      %p144 = scmp.eq.s32.totalorder %s18, 1
      %p145 = por %p143, %p144
      %p146 = scmp.ne.s32.totalorder %s138, %s141
      %p147 = scmp.eq.s32.totalorder %s18, 0
      %p148 = por %p146, %p147
      %p149 = scmp.ne.s32.totalorder %s138, %s141
      %p150 = scmp.eq.s32.totalorder %s23, 1
      %p151 = por %p149, %p150
      %p152 = scmp.ne.s32.totalorder %s141, %s142
      %p153 = scmp.eq.s32.totalorder %s23, 0
      %p154 = por %p152, %p153
      %p155 = scmp.ne.s32.totalorder %s141, %s142
      %p156 = scmp.eq.s32.totalorder %s24, 1
      %p157 = por %p155, %p156
      %p159 = scmp.ne.s32.totalorder %s142, %s158
      %p160 = scmp.eq.s32.totalorder %s24, 0
      %p161 = por %p159, %p160
      %p162 = scmp.le.s32.totalorder 1, %s18
      %p163 = scmp.lt.s32.totalorder %s18, 3
      %p164 = pnand %p162, %p163
      %p165 = pneg %p164
      // Predicated region
      $region9: #{tpu_custom_call.1} parent=5 // pred_check
        _
      $region10: #{tpu_custom_call.1} parent=5 // pred_check_branch
        %167 = sbr.rel (%p164) target = $region12
      $region11: #{tpu_custom_call.1} parent=5 // pred_region
        %s168 = ssub.s32 %s18, 1
        // Predicated region
        $region13: #{tpu_custom_call.1} parent=11 // pred_check
          %p169 = pneg %p65
        $region14: #{tpu_custom_call.1} parent=11 // pred_check_branch
          %171 = sbr.rel (%p169) target = $region16
        $region15: #{tpu_custom_call.1} parent=11 // pred_region
          %s173 = ssub.s32 512, 512
          %174 = vsyncadd [#allocation6], %s173
          %s175 = sshll.u32 [#allocation5], 4
          %s176 = int_to_ptr.vmem [resolvable:$true] %s175
          %181 = dma.hbm_to_vmem [thread:$0]  %s1, 512, %s176, [#allocation6], 128, 128, 8
        $region16: #{tpu_custom_call.1} parent=11 // pred_fallthru
          _
        // Predicated region
        $region17: #{tpu_custom_call.1} parent=11 // pred_check
          %p182 = pneg %p86
        $region18: #{tpu_custom_call.1} parent=11 // pred_check_branch
          %184 = sbr.rel (%p182) target = $region20
        $region19: #{tpu_custom_call.1} parent=11 // pred_region
          _
        $region20: #{tpu_custom_call.1} parent=11 // pred_fallthru
          _
        // Predicated region
        $region21: #{tpu_custom_call.1} parent=11 // pred_check
          %p185 = pneg %p107
        $region22: #{tpu_custom_call.1} parent=11 // pred_check_branch
          %187 = sbr.rel (%p185) target = $region24
        $region23: #{tpu_custom_call.1} parent=11 // pred_region
          %s189 = ssub.s32 2048, 2048
          %190 = vsyncadd [#allocation6], %s189
          %s191 = sshll.u32 [#allocation7], 4
          %s192 = int_to_ptr.vmem [resolvable:$true] %s191
          %197 = dma.hbm_to_vmem [thread:$0]  %s3, 2048, %s192, [#allocation6], 128, 128, 8
        $region24: #{tpu_custom_call.1} parent=11 // pred_fallthru
          _
        // Predicated region
        $region25: #{tpu_custom_call.1} parent=11 // pred_check
          %p198 = pneg %p128
        $region26: #{tpu_custom_call.1} parent=11 // pred_check_branch
          %200 = sbr.rel (%p198) target = $region28
        $region27: #{tpu_custom_call.1} parent=11 // pred_region
          _
        $region28: #{tpu_custom_call.1} parent=11 // pred_fallthru
          _
      $region12: #{tpu_custom_call.1} parent=5 // pred_fallthru
        _
      %p201 = scmp.lt.s32.totalorder %s18, 2
      // Predicated region
      $region29: #{tpu_custom_call.1} parent=5 // pred_check
        %p202 = pneg %p201
      $region30: #{tpu_custom_call.1} parent=5 // pred_check_branch
        %204 = sbr.rel (%p202) target = $region32
      $region31: #{tpu_custom_call.1} parent=5 // pred_region
        // Predicated region
        $region33: #{tpu_custom_call.1} parent=31 // pred_check
          %p205 = pneg %p38
        $region34: #{tpu_custom_call.1} parent=31 // pred_check_branch
          %207 = sbr.rel (%p205) target = $region36
        $region35: #{tpu_custom_call.1} parent=31 // pred_region
          %s208 = sand.u32 %s28, 1
          %s209 = scalar_lea.sflag [#allocation3], %s208
          %s210 = sand.u32 %s28, 1
          %s211 = smul.addr %s210, 16
          %s212 = scalar_lea.vmem [#allocation2], %s211
          %s214 = ssub.s32 256, 256
          %215 = vsyncadd %s209, %s214
          %s216 = smul.addr %s18, 128
          %s217 = scalar_lea.hbm %s0, %s216
          %s218 = sshll.u32 %s212, 4
          %s219 = int_to_ptr.vmem [resolvable:$true] %s218
          %224 = dma.hbm_to_vmem [thread:$0]  %s217, 256, %s219, %s209, 256, 128, 8
        $region36: #{tpu_custom_call.1} parent=31 // pred_fallthru
          _
      $region32: #{tpu_custom_call.1} parent=5 // pred_fallthru
        _
      %p225 = scmp.le.s32.totalorder 1, %s18
      %p226 = scmp.lt.s32.totalorder %s18, 3
      %p227 = pnand %p225, %p226
      %p228 = pneg %p227
      // Predicated region
      $region37: #{tpu_custom_call.1} parent=5 // pred_check
        _
      $region38: #{tpu_custom_call.1} parent=5 // pred_check_branch
        %230 = sbr.rel (%p227) target = $region40
      $region39: #{tpu_custom_call.1} parent=5 // pred_region
        %s231 = ssub.s32 %s18, 1
        %s232 = sand.u32 %s31, 1
        %s233 = scalar_lea.sflag [#allocation3], %s232
        %s234 = sand.u32 %s31, 1
        %s235 = smul.addr %s234, 16
        %s236 = scalar_lea.vmem [#allocation2], %s235
        // Predicated region
        $region41: #{tpu_custom_call.1} parent=39 // pred_check
          %p237 = pneg %p44
        $region42: #{tpu_custom_call.1} parent=39 // pred_check_branch
          %239 = sbr.rel (%p237) target = $region44
        $region43: #{tpu_custom_call.1} parent=39 // pred_region
          %240 = dma.done %s233, 256
        $region44: #{tpu_custom_call.1} parent=39 // pred_fallthru
          _
        // Predicated region
        $region45: #{tpu_custom_call.1} parent=39 // pred_check
          %p241 = pneg %p65
        $region46: #{tpu_custom_call.1} parent=39 // pred_check_branch
          %243 = sbr.rel (%p241) target = $region48
        $region47: #{tpu_custom_call.1} parent=39 // pred_region
          %244 = dma.done [#allocation6], 512
        $region48: #{tpu_custom_call.1} parent=39 // pred_fallthru
          _
        // Predicated region
        $region49: #{tpu_custom_call.1} parent=39 // pred_check
          %p245 = pneg %p107
        $region50: #{tpu_custom_call.1} parent=39 // pred_check_branch
          %247 = sbr.rel (%p245) target = $region52
        $region51: #{tpu_custom_call.1} parent=39 // pred_region
          %248 = dma.done [#allocation6], 2048
        $region52: #{tpu_custom_call.1} parent=39 // pred_fallthru
          _
        %s249 = sand.u32 %s31, 1
        %s250 = scalar_lea.sflag [#allocation3], %s249
        %s251 = sand.u32 %s31, 1
        %s252 = smul.addr %s251, 16
        %s253 = scalar_lea.vmem [#allocation2], %s252
        %p254 = pneg %p44
        %p255 = pneg %p41
        %p256 = pneg %p65
        %p257 = pneg %p62
        %p258 = pneg %p86
        %p259 = pneg %p83
        %p260 = pneg %p107
        %p261 = pneg %p104
        %p262 = pneg %p128
        %p263 = pneg %p125
        %p264 = pneg %p154
        %p265 = pneg %p151
        %s266 = sand.u32 %s141, 1
        %s267 = scalar_lea.sflag [#allocation4], %s266
        %s268 = sand.u32 %s141, 1
        %s269 = smul.addr %s268, 16
        %s270 = scalar_lea.vmem [#allocation8], %s269
        %s271 = smul.u32 8, %s23
        %v272 = vld [vmem:[%s236] sm:$0xff]
        %v273 = vld [vmem:[#allocation5] sm:$0xff]
        %v274 = vld [vmem:[#allocation5 + $0x8] sm:$0xff]
        %v275 = vld [vmem:[#allocation5 + $0x10] sm:$0xff]
        %v276 = vld [vmem:[#allocation5 + $0x18] sm:$0xff]
        %v277 = vld [vmem:[%s2] sm:$0x1]
        %v279 = vlaneseq
        %v280 = vshrl.u32 %v279, 7
        %v281 = vsub.s32 0, %v280
        %v282 = vrot.slane %v277, %v281
        %vm284 = vcmask 261120
        %v286 = vsel %vm284, %v272, 0
        %288 = vmatprep.subr.mxu0 0.0
        %289 = vmatpush1.msra.mxu0 %v273
        %290 = vmatprep.subr.mxu0 0.0
        %291 = vmatpush1.msra.mxu0 %v274
        %292 = vmatprep.subr.mxu0 0.0
        %293 = vmatpush1.msra.mxu0 %v275
        %294 = vmatprep.subr.mxu0 0.0
        %295 = vmatpush1.msra.mxu0 %v276
        %296 = vmatprep.subr.mxu0 0.0
        %297 = vmatpush1.msra.mxu0 0.0
        %298 = vmatprep.subr.mxu0 0.0
        %299 = vmatpush1.msra.mxu0 0.0
        %300 = vmatprep.subr.mxu0 0.0
        %301 = vmatpush1.msra.mxu0 0.0
        %302 = vmatprep.subr.mxu0 0.0
        %303 = vmatpush1.msra.mxu0 0.0
        %304 = vmatprep.subr.mxu0 0.0
        %305 = vmatpush1.msra.mxu0 0.0
        %306 = vmatprep.subr.mxu0 0.0
        %307 = vmatpush1.msra.mxu0 0.0
        %308 = vmatprep.subr.mxu0 0.0
        %309 = vmatpush1.msra.mxu0 0.0
        %310 = vmatprep.subr.mxu0 0.0
        %311 = vmatpush1.msra.mxu0 0.0
        %312 = vmatprep.subr.mxu0 0.0
        %313 = vmatpush1.msra.mxu0 0.0
        %314 = vmatprep.subr.mxu0 0.0
        %315 = vmatpush1.msra.mxu0 0.0
        %316 = vmatprep.subr.mxu0 0.0
        %317 = vmatpush1.msra.mxu0 0.0
        %318 = vmatprep.subr.mxu0 0.0
        %319 = vmatpush1.msra.mxu0 0.0
        %320 = vmatprep.subr.mxu0 0.0
        %321 = vmatpush1.msra.mxu0 0.0
        %322 = vmatprep.subr.mxu0 0.0
        %323 = vmatpush1.msra.mxu0 0.0
        %324 = vmatprep.subr.mxu0 0.0
        %325 = vmatpush1.msra.mxu0 0.0
        %326 = vmatprep.subr.mxu0 0.0
        %327 = vmatpush1.msra.mxu0 0.0
        %328 = vmatprep.subr.mxu0 0.0
        %329 = vmatpush1.msra.mxu0 0.0
        %330 = vmatprep.subr.mxu0 0.0
        %331 = vmatpush1.msra.mxu0 0.0
        %332 = vmatprep.subr.mxu0 0.0
        %333 = vmatpush1.msra.mxu0 0.0
        %334 = vmatprep.subr.mxu0 0.0
        %335 = vmatpush1.msra.mxu0 0.0
        %336 = vmatprep.subr.mxu0 0.0
        %337 = vmatpush1.msra.mxu0 0.0
        %338 = vmatprep.subr.mxu0 0.0
        %339 = vmatpush1.msra.mxu0 0.0
        %340 = vmatprep.subr.mxu0 0.0
        %341 = vmatpush1.msra.mxu0 0.0
        %342 = vmatprep.subr.mxu0 0.0
        %343 = vmatpush1.msra.mxu0 0.0
        %344 = vmatprep.subr.mxu0 0.0
        %345 = vmatpush1.msra.mxu0 0.0
        %346 = vmatprep.subr.mxu0 0.0
        %347 = vmatpush1.msra.mxu0 0.0
        %348 = vmatprep.subr.mxu0 0.0
        %349 = vmatpush1.msra.mxu0 0.0
        %350 = vmatprep.subr.mxu0 0.0
        %351 = vmatpush1.msra.mxu0 0.0
        %352 = vmatprep.mubr.f32.mxu0 0.0
        %353 = vmatmul.mubr.f32.gmra.mrb[0].mxu0 %v286
        %v354 = vpop.f32.mrb[0].mxu0
        %v355 = vadd.f32 %v282, %v354
        %v356 = vpop.f32.mrb[0].mxu0
        %357 = vdwg.mxu0
        %v358 = vmax.f32 %v355, 0.0
        %v359 = vld [vmem:[#allocation7] sm:$0xff]
        %v360 = vld [vmem:[#allocation7 + $0x8] sm:$0xff]
        %v361 = vld [vmem:[#allocation7 + $0x10] sm:$0xff]
        %v362 = vld [vmem:[#allocation7 + $0x18] sm:$0xff]
        %v363 = vld [vmem:[#allocation7 + $0x20] sm:$0xff]
        %v364 = vld [vmem:[#allocation7 + $0x28] sm:$0xff]
        %v365 = vld [vmem:[#allocation7 + $0x30] sm:$0xff]
        %v366 = vld [vmem:[#allocation7 + $0x38] sm:$0xff]
        %v367 = vld [vmem:[#allocation7 + $0x40] sm:$0xff]
        %v368 = vld [vmem:[#allocation7 + $0x48] sm:$0xff]
        %v369 = vld [vmem:[#allocation7 + $0x50] sm:$0xff]
        %v370 = vld [vmem:[#allocation7 + $0x58] sm:$0xff]
        %v371 = vld [vmem:[#allocation7 + $0x60] sm:$0xff]
        %v372 = vld [vmem:[#allocation7 + $0x68] sm:$0xff]
        %v373 = vld [vmem:[#allocation7 + $0x70] sm:$0xff]
        %v374 = vld [vmem:[#allocation7 + $0x78] sm:$0xff]
        %v375 = vld [vmem:[%s4] sm:$0x1]
        %v377 = vlaneseq
        %v378 = vshrl.u32 %v377, 7
        %v379 = vsub.s32 0, %v378
        %v380 = vrot.slane %v375, %v379
        %382 = vmatprep.subr.mxu0 0.0
        %383 = vmatpush1.msra.mxu0 %v359
        %384 = vmatprep.subr.mxu0 0.0
        %385 = vmatpush1.msra.mxu0 %v360
        %386 = vmatprep.subr.mxu0 0.0
        %387 = vmatpush1.msra.mxu0 %v361
        %388 = vmatprep.subr.mxu0 0.0
        %389 = vmatpush1.msra.mxu0 %v362
        %390 = vmatprep.subr.mxu0 0.0
        %391 = vmatpush1.msra.mxu0 %v363
        %392 = vmatprep.subr.mxu0 0.0
        %393 = vmatpush1.msra.mxu0 %v364
        %394 = vmatprep.subr.mxu0 0.0
        %395 = vmatpush1.msra.mxu0 %v365
        %396 = vmatprep.subr.mxu0 0.0
        %397 = vmatpush1.msra.mxu0 %v366
        %398 = vmatprep.subr.mxu0 0.0
        %399 = vmatpush1.msra.mxu0 %v367
        %400 = vmatprep.subr.mxu0 0.0
        %401 = vmatpush1.msra.mxu0 %v368
        %402 = vmatprep.subr.mxu0 0.0
        %403 = vmatpush1.msra.mxu0 %v369
        %404 = vmatprep.subr.mxu0 0.0
        %405 = vmatpush1.msra.mxu0 %v370
        %406 = vmatprep.subr.mxu0 0.0
        %407 = vmatpush1.msra.mxu0 %v371
        %408 = vmatprep.subr.mxu0 0.0
        %409 = vmatpush1.msra.mxu0 %v372
        %410 = vmatprep.subr.mxu0 0.0
        %411 = vmatpush1.msra.mxu0 %v373
        %412 = vmatprep.subr.mxu0 0.0
        %413 = vmatpush1.msra.mxu0 %v374
        %414 = vmatprep.subr.mxu0 0.0
        %415 = vmatpush1.msra.mxu0 0.0
        %416 = vmatprep.subr.mxu0 0.0
        %417 = vmatpush1.msra.mxu0 0.0
        %418 = vmatprep.subr.mxu0 0.0
        %419 = vmatpush1.msra.mxu0 0.0
        %420 = vmatprep.subr.mxu0 0.0
        %421 = vmatpush1.msra.mxu0 0.0
        %422 = vmatprep.subr.mxu0 0.0
        %423 = vmatpush1.msra.mxu0 0.0
        %424 = vmatprep.subr.mxu0 0.0
        %425 = vmatpush1.msra.mxu0 0.0
        %426 = vmatprep.subr.mxu0 0.0
        %427 = vmatpush1.msra.mxu0 0.0
        %428 = vmatprep.subr.mxu0 0.0
        %429 = vmatpush1.msra.mxu0 0.0
        %430 = vmatprep.subr.mxu0 0.0
        %431 = vmatpush1.msra.mxu0 0.0
        %432 = vmatprep.subr.mxu0 0.0
        %433 = vmatpush1.msra.mxu0 0.0
        %434 = vmatprep.subr.mxu0 0.0
        %435 = vmatpush1.msra.mxu0 0.0
        %436 = vmatprep.subr.mxu0 0.0
        %437 = vmatpush1.msra.mxu0 0.0
        %438 = vmatprep.subr.mxu0 0.0
        %439 = vmatpush1.msra.mxu0 0.0
        %440 = vmatprep.subr.mxu0 0.0
        %441 = vmatpush1.msra.mxu0 0.0
        %442 = vmatprep.subr.mxu0 0.0
        %443 = vmatpush1.msra.mxu0 0.0
        %444 = vmatprep.subr.mxu0 0.0
        %445 = vmatpush1.msra.mxu0 0.0
        %446 = vmatprep.mubr.f32.mxu0 0.0
        %447 = vmatmul.mubr.f32.gmra.mrb[0].mxu0 %v358
        %v448 = vpop.f32.mrb[0].mxu0
        %v449 = vadd.f32 %v380, %v448
        %v450 = vpop.f32.mrb[0].mxu0
        %451 = vdwg.mxu0
        %v452 = vmax.f32 %v449, 0.0
        %v454 = vcombine.high %v452, %v452
        %v456 = vunpack.c.l.s4 1966171168
        %v457 = vunpack.c.0.s8 %v456
        %v458 = vlaneseq
        %v459 = vshrl.u32 %v458, 7
        %v460 = vsub.s32 %v457, %v459
        %v461 = vrot.slane %v452, %v460
        %v463 = vunpack.c.l.s4 1966171168
        %v464 = vunpack.c.0.s8 %v463
        %v465 = vlaneseq
        %v466 = vshrl.u32 %v465, 7
        %v467 = vsub.s32 %v464, %v466
        %v468 = vrot.slane %v454, %v467
        %v469 = vcombine.high %v461, %v461
        %v470 = vcombine.high %v468, %v468
        %v472 = vunpack.c.l.s4 1966171168
        %v473 = vunpack.c.0.s8 %v472
        %v474 = vlaneseq
        %v475 = vshrl.u32 %v474, 7
        %v476 = vsub.s32 %v473, %v475
        %v477 = vrot.slane %v461, %v476
        %v479 = vunpack.c.l.s4 1966171168
        %v480 = vunpack.c.0.s8 %v479
        %v481 = vlaneseq
        %v482 = vshrl.u32 %v481, 7
        %v483 = vsub.s32 %v480, %v482
        %v484 = vrot.slane %v468, %v483
        %v486 = vunpack.c.l.s4 1966171168
        %v487 = vunpack.c.0.s8 %v486
        %v488 = vlaneseq
        %v489 = vshrl.u32 %v488, 7
        %v490 = vsub.s32 %v487, %v489
        %v491 = vrot.slane %v469, %v490
        %v493 = vunpack.c.l.s4 1966171168
        %v494 = vunpack.c.0.s8 %v493
        %v495 = vlaneseq
        %v496 = vshrl.u32 %v495, 7
        %v497 = vsub.s32 %v494, %v496
        %v498 = vrot.slane %v470, %v497
        %v499 = vcombine.high %v477, %v477
        %v500 = vcombine.high %v484, %v484
        %v501 = vcombine.high %v491, %v491
        %v502 = vcombine.high %v498, %v498
        %511 = vst [vmem:[%s270] sm:$0x1] %v477
        %512 = vst [vmem:[%s270 + $0x2] sm:$0x1] %v491
        %513 = vst [vmem:[%s270 + $0x4] sm:$0x1] %v499
        %514 = vst [vmem:[%s270 + $0x6] sm:$0x1] %v501
        %515 = vst [vmem:[%s270 + $0x8] sm:$0x1] %v484
        %516 = vst [vmem:[%s270 + $0xa] sm:$0x1] %v498
        %517 = vst [vmem:[%s270 + $0xc] sm:$0x1] %v500
        %518 = vst [vmem:[%s270 + $0xe] sm:$0x1] %v502
        %s519 = scalar_lea.vmem %s236, 8 [#allocation2]
        %v520 = vld [vmem:[%s519] sm:$0xff]
        %v521 = vld [vmem:[#allocation5] sm:$0xff]
        %v522 = vld [vmem:[#allocation5 + $0x8] sm:$0xff]
        %v523 = vld [vmem:[#allocation5 + $0x10] sm:$0xff]
        %v524 = vld [vmem:[#allocation5 + $0x18] sm:$0xff]
        %v525 = vld [vmem:[%s2] sm:$0x1]
        %v527 = vlaneseq
        %v528 = vshrl.u32 %v527, 7
        %v529 = vsub.s32 0, %v528
        %v530 = vrot.slane %v525, %v529
        %v533 = vsel %vm284, %v520, 0
        %535 = vmatprep.subr.mxu0 0.0
        %536 = vmatpush1.msra.mxu0 %v521
        %537 = vmatprep.subr.mxu0 0.0
        %538 = vmatpush1.msra.mxu0 %v522
        %539 = vmatprep.subr.mxu0 0.0
        %540 = vmatpush1.msra.mxu0 %v523
        %541 = vmatprep.subr.mxu0 0.0
        %542 = vmatpush1.msra.mxu0 %v524
        %543 = vmatprep.subr.mxu0 0.0
        %544 = vmatpush1.msra.mxu0 0.0
        %545 = vmatprep.subr.mxu0 0.0
        %546 = vmatpush1.msra.mxu0 0.0
        %547 = vmatprep.subr.mxu0 0.0
        %548 = vmatpush1.msra.mxu0 0.0
        %549 = vmatprep.subr.mxu0 0.0
        %550 = vmatpush1.msra.mxu0 0.0
        %551 = vmatprep.subr.mxu0 0.0
        %552 = vmatpush1.msra.mxu0 0.0
        %553 = vmatprep.subr.mxu0 0.0
        %554 = vmatpush1.msra.mxu0 0.0
        %555 = vmatprep.subr.mxu0 0.0
        %556 = vmatpush1.msra.mxu0 0.0
        %557 = vmatprep.subr.mxu0 0.0
        %558 = vmatpush1.msra.mxu0 0.0
        %559 = vmatprep.subr.mxu0 0.0
        %560 = vmatpush1.msra.mxu0 0.0
        %561 = vmatprep.subr.mxu0 0.0
        %562 = vmatpush1.msra.mxu0 0.0
        %563 = vmatprep.subr.mxu0 0.0
        %564 = vmatpush1.msra.mxu0 0.0
        %565 = vmatprep.subr.mxu0 0.0
        %566 = vmatpush1.msra.mxu0 0.0
        %567 = vmatprep.subr.mxu0 0.0
        %568 = vmatpush1.msra.mxu0 0.0
        %569 = vmatprep.subr.mxu0 0.0
        %570 = vmatpush1.msra.mxu0 0.0
        %571 = vmatprep.subr.mxu0 0.0
        %572 = vmatpush1.msra.mxu0 0.0
        %573 = vmatprep.subr.mxu0 0.0
        %574 = vmatpush1.msra.mxu0 0.0
        %575 = vmatprep.subr.mxu0 0.0
        %576 = vmatpush1.msra.mxu0 0.0
        %577 = vmatprep.subr.mxu0 0.0
        %578 = vmatpush1.msra.mxu0 0.0
        %579 = vmatprep.subr.mxu0 0.0
        %580 = vmatpush1.msra.mxu0 0.0
        %581 = vmatprep.subr.mxu0 0.0
        %582 = vmatpush1.msra.mxu0 0.0
        %583 = vmatprep.subr.mxu0 0.0
        %584 = vmatpush1.msra.mxu0 0.0
        %585 = vmatprep.subr.mxu0 0.0
        %586 = vmatpush1.msra.mxu0 0.0
        %587 = vmatprep.subr.mxu0 0.0
        %588 = vmatpush1.msra.mxu0 0.0
        %589 = vmatprep.subr.mxu0 0.0
        %590 = vmatpush1.msra.mxu0 0.0
        %591 = vmatprep.subr.mxu0 0.0
        %592 = vmatpush1.msra.mxu0 0.0
        %593 = vmatprep.subr.mxu0 0.0
        %594 = vmatpush1.msra.mxu0 0.0
        %595 = vmatprep.subr.mxu0 0.0
        %596 = vmatpush1.msra.mxu0 0.0
        %597 = vmatprep.subr.mxu0 0.0
        %598 = vmatpush1.msra.mxu0 0.0
        %599 = vmatprep.mubr.f32.mxu0 0.0
        %600 = vmatmul.mubr.f32.gmra.mrb[0].mxu0 %v533
        %v601 = vpop.f32.mrb[0].mxu0
        %v602 = vadd.f32 %v530, %v601
        %v603 = vpop.f32.mrb[0].mxu0
        %604 = vdwg.mxu0
        %v605 = vmax.f32 %v602, 0.0
        %v606 = vld [vmem:[#allocation7] sm:$0xff]
        %v607 = vld [vmem:[#allocation7 + $0x8] sm:$0xff]
        %v608 = vld [vmem:[#allocation7 + $0x10] sm:$0xff]
        %v609 = vld [vmem:[#allocation7 + $0x18] sm:$0xff]
        %v610 = vld [vmem:[#allocation7 + $0x20] sm:$0xff]
        %v611 = vld [vmem:[#allocation7 + $0x28] sm:$0xff]
        %v612 = vld [vmem:[#allocation7 + $0x30] sm:$0xff]
        %v613 = vld [vmem:[#allocation7 + $0x38] sm:$0xff]
        %v614 = vld [vmem:[#allocation7 + $0x40] sm:$0xff]
        %v615 = vld [vmem:[#allocation7 + $0x48] sm:$0xff]
        %v616 = vld [vmem:[#allocation7 + $0x50] sm:$0xff]
        %v617 = vld [vmem:[#allocation7 + $0x58] sm:$0xff]
        %v618 = vld [vmem:[#allocation7 + $0x60] sm:$0xff]
        %v619 = vld [vmem:[#allocation7 + $0x68] sm:$0xff]
        %v620 = vld [vmem:[#allocation7 + $0x70] sm:$0xff]
        %v621 = vld [vmem:[#allocation7 + $0x78] sm:$0xff]
        %v622 = vld [vmem:[%s4] sm:$0x1]
        %v624 = vlaneseq
        %v625 = vshrl.u32 %v624, 7
        %v626 = vsub.s32 0, %v625
        %v627 = vrot.slane %v622, %v626
        %629 = vmatprep.subr.mxu0 0.0
        %630 = vmatpush1.msra.mxu0 %v606
        %631 = vmatprep.subr.mxu0 0.0
        %632 = vmatpush1.msra.mxu0 %v607
        %633 = vmatprep.subr.mxu0 0.0
        %634 = vmatpush1.msra.mxu0 %v608
        %635 = vmatprep.subr.mxu0 0.0
        %636 = vmatpush1.msra.mxu0 %v609
        %637 = vmatprep.subr.mxu0 0.0
        %638 = vmatpush1.msra.mxu0 %v610
        %639 = vmatprep.subr.mxu0 0.0
        %640 = vmatpush1.msra.mxu0 %v611
        %641 = vmatprep.subr.mxu0 0.0
        %642 = vmatpush1.msra.mxu0 %v612
        %643 = vmatprep.subr.mxu0 0.0
        %644 = vmatpush1.msra.mxu0 %v613
        %645 = vmatprep.subr.mxu0 0.0
        %646 = vmatpush1.msra.mxu0 %v614
        %647 = vmatprep.subr.mxu0 0.0
        %648 = vmatpush1.msra.mxu0 %v615
        %649 = vmatprep.subr.mxu0 0.0
        %650 = vmatpush1.msra.mxu0 %v616
        %651 = vmatprep.subr.mxu0 0.0
        %652 = vmatpush1.msra.mxu0 %v617
        %653 = vmatprep.subr.mxu0 0.0
        %654 = vmatpush1.msra.mxu0 %v618
        %655 = vmatprep.subr.mxu0 0.0
        %656 = vmatpush1.msra.mxu0 %v619
        %657 = vmatprep.subr.mxu0 0.0
        %658 = vmatpush1.msra.mxu0 %v620
        %659 = vmatprep.subr.mxu0 0.0
        %660 = vmatpush1.msra.mxu0 %v621
        %661 = vmatprep.subr.mxu0 0.0
        %662 = vmatpush1.msra.mxu0 0.0
        %663 = vmatprep.subr.mxu0 0.0
        %664 = vmatpush1.msra.mxu0 0.0
        %665 = vmatprep.subr.mxu0 0.0
        %666 = vmatpush1.msra.mxu0 0.0
        %667 = vmatprep.subr.mxu0 0.0
        %668 = vmatpush1.msra.mxu0 0.0
        %669 = vmatprep.subr.mxu0 0.0
        %670 = vmatpush1.msra.mxu0 0.0
        %671 = vmatprep.subr.mxu0 0.0
        %672 = vmatpush1.msra.mxu0 0.0
        %673 = vmatprep.subr.mxu0 0.0
        %674 = vmatpush1.msra.mxu0 0.0
        %675 = vmatprep.subr.mxu0 0.0
        %676 = vmatpush1.msra.mxu0 0.0
        %677 = vmatprep.subr.mxu0 0.0
        %678 = vmatpush1.msra.mxu0 0.0
        %679 = vmatprep.subr.mxu0 0.0
        %680 = vmatpush1.msra.mxu0 0.0
        %681 = vmatprep.subr.mxu0 0.0
        %682 = vmatpush1.msra.mxu0 0.0
        %683 = vmatprep.subr.mxu0 0.0
        %684 = vmatpush1.msra.mxu0 0.0
        %685 = vmatprep.subr.mxu0 0.0
        %686 = vmatpush1.msra.mxu0 0.0
        %687 = vmatprep.subr.mxu0 0.0
        %688 = vmatpush1.msra.mxu0 0.0
        %689 = vmatprep.subr.mxu0 0.0
        %690 = vmatpush1.msra.mxu0 0.0
        %691 = vmatprep.subr.mxu0 0.0
        %692 = vmatpush1.msra.mxu0 0.0
        %693 = vmatprep.mubr.f32.mxu0 0.0
        %694 = vmatmul.mubr.f32.gmra.mrb[0].mxu0 %v605
        %v695 = vpop.f32.mrb[0].mxu0
        %v696 = vadd.f32 %v627, %v695
        %v697 = vpop.f32.mrb[0].mxu0
        %698 = vdwg.mxu0
        %v699 = vmax.f32 %v696, 0.0
        %v701 = vcombine.high %v699, %v699
        %v703 = vunpack.c.l.s4 1966171168
        %v704 = vunpack.c.0.s8 %v703
        %v705 = vlaneseq
        %v706 = vshrl.u32 %v705, 7
        %v707 = vsub.s32 %v704, %v706
        %v708 = vrot.slane %v699, %v707
        %v710 = vunpack.c.l.s4 1966171168
        %v711 = vunpack.c.0.s8 %v710
        %v712 = vlaneseq
        %v713 = vshrl.u32 %v712, 7
        %v714 = vsub.s32 %v711, %v713
        %v715 = vrot.slane %v701, %v714
        %v716 = vcombine.high %v708, %v708
        %v717 = vcombine.high %v715, %v715
        %v719 = vunpack.c.l.s4 1966171168
        %v720 = vunpack.c.0.s8 %v719
        %v721 = vlaneseq
        %v722 = vshrl.u32 %v721, 7
        %v723 = vsub.s32 %v720, %v722
        %v724 = vrot.slane %v708, %v723
        %v726 = vunpack.c.l.s4 1966171168
        %v727 = vunpack.c.0.s8 %v726
        %v728 = vlaneseq
        %v729 = vshrl.u32 %v728, 7
        %v730 = vsub.s32 %v727, %v729
        %v731 = vrot.slane %v715, %v730
        %v733 = vunpack.c.l.s4 1966171168
        %v734 = vunpack.c.0.s8 %v733
        %v735 = vlaneseq
        %v736 = vshrl.u32 %v735, 7
        %v737 = vsub.s32 %v734, %v736
        %v738 = vrot.slane %v716, %v737
        %v740 = vunpack.c.l.s4 1966171168
        %v741 = vunpack.c.0.s8 %v740
        %v742 = vlaneseq
        %v743 = vshrl.u32 %v742, 7
        %v744 = vsub.s32 %v741, %v743
        %v745 = vrot.slane %v717, %v744
        %v746 = vcombine.high %v724, %v724
        %v747 = vcombine.high %v731, %v731
        %v748 = vcombine.high %v738, %v738
        %v749 = vcombine.high %v745, %v745
        %758 = vst [vmem:[%s270 + $0x1] sm:$0x1] %v724
        %759 = vst [vmem:[%s270 + $0x3] sm:$0x1] %v738
        %760 = vst [vmem:[%s270 + $0x5] sm:$0x1] %v746
        %761 = vst [vmem:[%s270 + $0x7] sm:$0x1] %v748
        %762 = vst [vmem:[%s270 + $0x9] sm:$0x1] %v731
        %763 = vst [vmem:[%s270 + $0xb] sm:$0x1] %v745
        %764 = vst [vmem:[%s270 + $0xd] sm:$0x1] %v747
        %765 = vst [vmem:[%s270 + $0xf] sm:$0x1] %v749
        %s766 = sand.u32 %s141, 1
        %s767 = scalar_lea.sflag [#allocation4], %s766
        %s768 = sand.u32 %s141, 1
        %s769 = smul.addr %s768, 16
        %s770 = scalar_lea.vmem [#allocation8], %s769
        // Predicated region
        $region53: #{tpu_custom_call.1} parent=39 // pred_check
          %p771 = pneg %p151
        $region54: #{tpu_custom_call.1} parent=39 // pred_check_branch
          %773 = sbr.rel (%p771) target = $region56
        $region55: #{tpu_custom_call.1} parent=39 // pred_region
          %s774 = smul.u32 8, %s23
          %s776 = ssub.s32 256, 256
          %777 = vsyncadd %s767, %s776
          %s778 = smul.addr %s774, 32
          %s779 = scalar_lea.hbm %s5, %s778
          %s780 = sshll.u32 %s770, 4
          %s781 = int_to_ptr.vmem [resolvable:$true] %s780
          %786 = dma.vmem_to_hbm [thread:$0]  %s781, 256, %s779, %s767, 32, 32, 2
        $region56: #{tpu_custom_call.1} parent=39 // pred_fallthru
          _
      $region40: #{tpu_custom_call.1} parent=5 // pred_fallthru
        _
      %p787 = scmp.le.s32.totalorder 2, %s18
      // Predicated region
      $region57: #{tpu_custom_call.1} parent=5 // pred_check
        %p788 = pneg %p787
      $region58: #{tpu_custom_call.1} parent=5 // pred_check_branch
        %790 = sbr.rel (%p788) target = $region60
      $region59: #{tpu_custom_call.1} parent=5 // pred_region
        %s791 = ssub.s32 %s18, 2
        // Predicated region
        $region61: #{tpu_custom_call.1} parent=59 // pred_check
          %p792 = pneg %p157
        $region62: #{tpu_custom_call.1} parent=59 // pred_check_branch
          %794 = sbr.rel (%p792) target = $region64
        $region63: #{tpu_custom_call.1} parent=59 // pred_region
          %s795 = sand.u32 %s142, 1
          %s796 = scalar_lea.sflag [#allocation4], %s795
          %s797 = sand.u32 %s142, 1
          %s798 = smul.addr %s797, 16
          %s799 = scalar_lea.vmem [#allocation8], %s798
          %800 = dma.done %s796, 256
        $region64: #{tpu_custom_call.1} parent=59 // pred_fallthru
          _
      $region60: #{tpu_custom_call.1} parent=5 // pred_fallthru
        _
    $region6: #{tpu_custom_call.1} parent=1 // loop_footer
      %s22 = sadd.s32 1, %s18
    $region7: #{tpu_custom_call.1} parent=1 // loop_footer_branch
      %17 = sbr.rel target = $region3
    $region8: #{tpu_custom_call.1} parent=1 // loop_exit
      _
    %801 = vsyncpa [#allocation3], 1
    %s802 = scalar_lea.sflag [#allocation3], 1
    %803 = vsyncpa %s802, 1
    %804 = vsyncpa [#allocation6], 1
    %805 = vsyncpa [#allocation4], 1
    %s806 = scalar_lea.sflag [#allocation4], 1
    %807 = vsyncpa %s806, 1

</llo_original>
